<compile_context>
chip_gen: v5e
topology: v5e:2x2
jax: 0.10.0
libtpu: 0.0.40
codegen_flags: <defaults>
</compile_context>

<pallas_src>
import functools
import math

import jax
import jax.numpy as jnp
from jax import lax
from jax.experimental import pallas as pl
from jax.experimental.pallas import tpu as pltpu


# (name, Cin, Cout, dilation, fused BN(train)+ReLU?).  The order also defines
# how the per-layer parameter refs are packed / unpacked for the fused kernel.
_LAYERS = (
    ("conv11",       3,  16, 1, True),
    ("conv12",      16,  32, 1, True),
    ("conv21",      32,  64, 1, True),
    ("atroconv21",  64,  64, 2, True),
    ("conv22",      64, 128, 1, True),
    ("atroconv22", 128, 128, 2, True),
    ("conv31",     128, 128, 1, True),
    ("conv32",     128, 256, 1, True),
    ("conv33",     256, 256, 1, True),
    ("conv33d",    256, 256, 1, True),
    ("conv32d",    256, 128, 1, True),
    ("conv31d",    128, 128, 1, True),
    ("conv22d",    128,  64, 1, True),
    ("conv21d",     64,  32, 1, True),
    ("conv12d",     32,  16, 1, True),
    ("conv11d",     16,   3, 1, False),   # conv bias only: no BN, no ReLU
)
_CFG = {name: (cin, cout, dil, bn) for name, cin, cout, dil, bn in _LAYERS}


# ----------------------------------------------------------------------------
# pltpu.roll rotate-direction probe (pin the convention with one tiny eager
# pallas_call so the conv tap shifts are correct regardless of jax version).
# ----------------------------------------------------------------------------
_ROLL_SHIFT_SIGN = [None]   # +1 if pltpu.roll matches jnp.roll, -1 otherwise


def detect_roll_convention():
    if _ROLL_SHIFT_SIGN[0] is not None:
        return

    def probe_kernel(x_ref, o_ref):
        o_ref[...] = pltpu.roll(x_ref[...], 1, 0)

    x = jnp.arange(8, dtype=jnp.float32).reshape(8, 1)
    vmem = pl.BlockSpec(memory_space=pltpu.MemorySpace.VMEM)
    y = pl.pallas_call(
        probe_kernel,
        out_shape=jax.ShapeDtypeStruct((8, 1), jnp.float32),
        in_specs=[vmem], out_specs=vmem,
    )(x)
    first = float(y[0, 0])
    if first == 7.0:        # jnp.roll convention: out[i] = in[(i - shift) % n]
        _ROLL_SHIFT_SIGN[0] = 1
    elif first == 1.0:      # opposite convention: out[i] = in[(i + shift) % n]
        _ROLL_SHIFT_SIGN[0] = -1
    else:
        raise RuntimeError("unexpected pltpu.roll behaviour in probe")


def _roll_shift_for(off, m):
    """pltpu.roll shift amount so that out[r] = in[(r + off) % m]."""
    sign = _ROLL_SHIFT_SIGN[0]
    assert sign is not None, "call detect_roll_convention() before tracing"
    return (-sign * off) % m


# ----------------------------------------------------------------------------
# The fused whole-network kernel
# ----------------------------------------------------------------------------
def _filternet_kernel(*refs, N, H, W, eps):
    # refs = (x, noise21, noise22,
    #         per layer: w [, gamma, beta] [, bias]  (order of _LAYERS),
    #         out)
    M = N * H * W
    x_ref, n21_ref, n22_ref = refs[0], refs[1], refs[2]
    out_ref = refs[-1]

    # ---- unpack per-layer parameter refs (same order the wrapper packed) ----
    prm = {}
    it = iter(refs[3:-1])
    for name, _, _, _, bn in _LAYERS:
        w = next(it)
        if bn:
            prm[name] = (w, next(it), next(it), None)     # w, gamma, beta
        else:
            prm[name] = (w, None, None, next(it))         # w, bias

    # ---- per-row validity masks for the shifted conv taps (shared) ----------
    # Row r of the flattened (M, C) activation is pixel (n, i, j) with
    # i = (r // W) % H and j = r % W.
    r = lax.broadcasted_iota(jnp.int32, (M, 1), 0)
    jj = r % W
    ii = (r // W) % H
    col_mask, row_mask = {}, {}
    for d in (1, 2):
        for s in (-1, 1):
            col_mask[(d, s)] = ((jj + s * d >= 0) &
                                (jj + s * d < W)).astype(jnp.float32)
            row_mask[(d, s)] = ((ii + s * d >= 0) &
                                (ii + s * d < H)).astype(jnp.float32)

    def shift_rows(v, off):
        # out[r] = v[(r + off) % M]; wrap-around rows are masked by the caller.
        return pltpu.roll(v, _roll_shift_for(off, M), 0)

    def conv3x3(x, w_ref, dil, cout):
        """'same' 3x3 conv (dilation dil) on flattened NHWC rows.

        x: (M, Cin) f32.  w_ref: (9, Cin, Cout) bf16, tap-major (ky*3 + kx).
        Returns (M, Cout) f32.
        """
        # Column (W axis) shifted + masked copies of the input, cast to bf16.
        xs = []
        for b in range(3):
            off = (b - 1) * dil
            if off == 0:
                v = x
            else:
                v = shift_rows(x, off) * col_mask[(dil, b - 1)]
            xs.append(v.astype(jnp.bfloat16))
        # For each row offset a: accumulate the 3 taps, then row-shift + mask.
        acc = None
        for a in range(3):
            t = None
            for b in range(3):
                d_ = jnp.dot(xs[b], w_ref[a * 3 + b],
                             preferred_element_type=jnp.float32)
                t = d_ if t is None else t + d_
            off = (a - 1) * dil
            if off != 0:
                t = shift_rows(t, off * W) * row_mask[(dil, a - 1)]
            acc = t if acc is None else acc + t
        return acc

    def bn_relu(y, g_ref, b_ref):
        # Training-mode BatchNorm2d: biased batch stats over N*H*W, eps=1e-5,
        # single pass (sum + sum of squares), then affine + ReLU.
        inv_m = 1.0 / float(M)
        mean = jnp.sum(y, axis=0, keepdims=True) * inv_m          # (1, C)
        var = jnp.sum(y * y, axis=0, keepdims=True) * inv_m - mean * mean
        scale = g_ref[...] * lax.rsqrt(jnp.maximum(var, 0.0) + eps)
        return jnp.maximum((y - mean) * scale + b_ref[...], 0.0)

    def layer(name, x):
        _, cout, dil, bn = _CFG[name]
        w, g, b, bias = prm[name]
        y = conv3x3(x, w, dil, cout)
        if bn:
            # conv bias omitted: it cancels exactly inside (y - mean).
            return bn_relu(y, g, b)
        return y + bias[...]

    # ---------------- forward graph (mirrors FilterNet.forward) -------------
    x11 = layer("conv11", x_ref[...])
    x12 = layer("conv12", x11)
    x21 = layer("conv21", x12)
    feature21 = x21 + n21_ref[...]          # gaussian-noise skip feature
    x22 = layer("conv22", x21)
    feature22 = x22 + n22_ref[...]          # gaussian-noise skip feature
    x31 = layer("conv31", x22)
    x32 = layer("conv32", x31)
    x33 = layer("conv33", x32)
    x33d = layer("conv33d", x33)
    x32d = layer("conv32d", x33d)
    x31d = layer("conv31d", x32d)
    x31d = x31d + layer("atroconv22", feature22)   # dilated (2) branch + add
    x22d = layer("conv22d", x31d)
    x22d = x22d + layer("atroconv21", feature21)   # dilated (2) branch + add
    x21d = layer("conv21d", x22d)
    x12d = layer("conv12d", x21d)
    out_ref[...] = layer("conv11d", x12d)          # conv + bias only


# ----------------------------------------------------------------------------
# Wrapper: one pallas_call for the whole network
# ----------------------------------------------------------------------------
def filternet_forward(params, x_nhwc, noise21, noise22, *, eps=1e-5):
    """x_nhwc: (N, H, W, 3) f32.  noise2x: (N, H, W, 64/128) f32.

    Returns (N, H, W, 3) f32.
    """
    N, H, W, cin = x_nhwc.shape
    M = N * H * W

    # Zero-pad the 3 input channels to 8 so the first matmul K-dim is clean.
    cin_pad = max(8, cin)
    x_flat = x_nhwc.reshape(M, cin).astype(jnp.float32)
    if cin_pad > cin:
        x_flat = jnp.pad(x_flat, ((0, 0), (0, cin_pad - cin)))

    inputs = [x_flat,
              noise21.reshape(M, 64).astype(jnp.float32),
              noise22.reshape(M, 128).astype(jnp.float32)]
    for name, lcin, cout, _, bn in _LAYERS:
        w, bias, gamma, beta = params[name]
        if name == "conv11" and cin_pad > lcin:
            w = jnp.pad(w, ((0, 0), (0, cin_pad - lcin), (0, 0)))
        inputs.append(w.astype(jnp.bfloat16))                 # (9, Cin, Cout)
        if bn:
            inputs.append(gamma.reshape(1, cout).astype(jnp.float32))
            inputs.append(beta.reshape(1, cout).astype(jnp.float32))
        else:
            inputs.append(bias.reshape(1, cout).astype(jnp.float32))

    vmem = pl.BlockSpec(memory_space=pltpu.MemorySpace.VMEM)
    kern = functools.partial(_filternet_kernel, N=N, H=H, W=W, eps=eps)
    out = pl.pallas_call(
        kern,
        out_shape=jax.ShapeDtypeStruct((M, 3), jnp.float32),
        in_specs=[vmem] * len(inputs),
        out_specs=vmem,
        compiler_params=pltpu.CompilerParams(
            vmem_limit_bytes=48 * 1024 * 1024),
    )(*inputs)
    return out.reshape(N, H, W, 3)


# ----------------------------------------------------------------------------
# Parameter init (Kaiming-uniform-like bounds, as nn.Conv2d defaults)
# ----------------------------------------------------------------------------
def init_params(key):
    params = {}
    for name, cin, cout, _, _ in _LAYERS:
        key, kw, kb = jax.random.split(key, 3)
        bound = 1.0 / math.sqrt(cin * 9)
        w = jax.random.uniform(kw, (9, cin, cout), jnp.float32, -bound, bound)
        b = jax.random.uniform(kb, (cout,), jnp.float32, -bound, bound)
        gamma = jnp.ones((cout,), jnp.float32)     # BN affine init
        beta = jnp.zeros((cout,), jnp.float32)
        params[name] = (w, b, gamma, beta)
    return params


if __name__ == "__main__":
    detect_roll_convention()

    key = jax.random.PRNGKey(0)
    kparam, kx, kn1, kn2 = jax.random.split(key, 4)

    params = init_params(kparam)

    gaussian_rate = 1.0
    net_mode_train = True

    # PyTorch-style NCHW input at small shapes: (batch=2, channels=3, 16, 16)
    N, C, H, W = 2, 3, 16, 16
    x_nchw = jax.random.normal(kx, (N, C, H, W), jnp.float32)
    x_nhwc = jnp.transpose(x_nchw, (0, 2, 3, 1))

    if net_mode_train:
        noise21 = jax.random.normal(kn1, (N, H, W, 64), jnp.float32) * gaussian_rate
        noise22 = jax.random.normal(kn2, (N, H, W, 128), jnp.float32) * gaussian_rate
    else:
        noise21 = jnp.zeros((N, H, W, 64), jnp.float32)
        noise22 = jnp.zeros((N, H, W, 128), jnp.float32)

    fwd = jax.jit(filternet_forward)
    out_nhwc = fwd(params, x_nhwc, noise21, noise22)
    out_nchw = jnp.transpose(out_nhwc, (0, 3, 1, 2))   # back to PyTorch NCHW
    jax.block_until_ready(out_nchw)

    assert out_nchw.shape == (N, 3, H, W)
    assert bool(jnp.all(jnp.isfinite(out_nchw)))
    print("KERNEL_OK")
</pallas_src>

<mosaic_0001>
module attributes {stable_mosaic.version = 11 : i64} {
  func.func @probe_kernel(%arg0: memref<8x1xf32, #tpu.memory_space<vmem>>, %arg1: memref<8x1xf32, #tpu.memory_space<vmem>>) attributes {dimension_semantics = [], scalar_prefetch = 0 : i64, scratch_operands = 0 : i64, tpu.core_type = #tpu.core_type<tc>} {
    %c0 = arith.constant 0 : index
    %c0_0 = arith.constant 0 : index
    %0 = vector.load %arg0[%c0, %c0_0] : memref<8x1xf32, #tpu.memory_space<vmem>>, vector<8x1xf32>
    %c1_i32 = arith.constant 1 : i32
    %1 = tpu.dynamic_rotate %0 by %c1_i32 dim 0 : vector<8x1xf32>, i32 -> vector<8x1xf32>
    %c0_1 = arith.constant 0 : index
    %c0_2 = arith.constant 0 : index
    %2 = vector.load %arg1[%c0_1, %c0_2] : memref<8x1xf32, #tpu.memory_space<vmem>>, vector<8x1xf32>
    tpu.vector_store %arg1[%c0_1, %c0_2], %1 {strides = array<i32>} : memref<8x1xf32, #tpu.memory_space<vmem>>, vector<8x1xf32>,
    return
  }
}

</mosaic_0001>

<llo_original>
// kernel: tpu_custom_call.1
$region0: #{tpu_custom_call.1}
  #allocation0 [shape = 'u32[]', space=smem, size = 0x4, offset = 0x4, fixed_abs, tag = 'smem constant byte address 0x4 - core index']
  #allocation1 [shape = 'u32[72,128]{1,0:T(1,128)}', space=vmem, size = 0x9000, scoped, tag = 'internal scratch']
  %s0 = inlined_call_operand.vmem [shape: f32[8,1], index: 0, kind: input, shape index: {}]
  %s1 = inlined_call_operand.vmem [shape: f32[8,1], index: 1, kind: output, shape index: {}]
  %s2 = sld [smem:[#allocation0]]
  $region14: #{tpu_custom_call.1} parent=0
    _
  %s4 = ssub.s32 1, %s2
  %s5 = scalar_select 0, %s4, %s2
  // Predicated region
  $region2: #{tpu_custom_call.1} parent=0 // pred_check
    _
  $region3: #{tpu_custom_call.1} parent=0 // pred_check_branch
    %7 = sbr.rel (0) target = $region5
  $region4: #{tpu_custom_call.1} parent=0 // pred_region
    _
  $region5: #{tpu_custom_call.1} parent=0 // pred_fallthru
    _
  %v8 = vld [vmem:[%s0] sm:$0xff]
  %v9 = vrot.slane %v8, 7
  %vm10 = vcmask 7168
  %11 = vst.msk [vmem:[%s1] sm:$0xff] %vm10, %v9
  // Predicated region
  $region6: #{tpu_custom_call.1} parent=0 // pred_check
    _
  $region7: #{tpu_custom_call.1} parent=0 // pred_check_branch
    %13 = sbr.rel (0) target = $region9
  $region8: #{tpu_custom_call.1} parent=0 // pred_region
    _
  $region9: #{tpu_custom_call.1} parent=0 // pred_fallthru
    _
  // Predicated region
  $region10: #{tpu_custom_call.1} parent=0 // pred_check
    _
  $region11: #{tpu_custom_call.1} parent=0 // pred_check_branch
    %15 = sbr.rel (0) target = $region13
  $region12: #{tpu_custom_call.1} parent=0 // pred_region
    _
  $region13: #{tpu_custom_call.1} parent=0 // pred_fallthru
    _

</llo_original>
